<compile_context>
chip_gen: v7x
topology: tpu7x:2x2x1
jax: 0.10.0
libtpu: 0.0.40
codegen_flags: <defaults>
</compile_context>

<pallas_src>
import jax
import jax.numpy as jnp
from jax.experimental import pallas as pl
from jax.experimental.pallas import tpu as pltpu


def gaussian_actor_kernel(x_ref, w1_ref, b1_ref, w2_ref, b2_ref, w3_ref, b3_ref, mu_ref):
    x = x_ref[...]

    # Hidden layer 1: Linear + ReLU (bf16 MXU operands, f32 accumulation).
    h1 = jnp.dot(x.astype(jnp.bfloat16), w1_ref[...].astype(jnp.bfloat16),
                 preferred_element_type=jnp.float32) + b1_ref[...]
    h1 = jnp.maximum(h1, 0.0)

    # Hidden layer 2: Linear + ReLU.
    h2 = jnp.dot(h1.astype(jnp.bfloat16), w2_ref[...].astype(jnp.bfloat16),
                 preferred_element_type=jnp.float32) + b2_ref[...]
    h2 = jnp.maximum(h2, 0.0)

    # Output layer: Linear + sigmoid.  sigmoid(z) = 0.5*tanh(0.5*z) + 0.5 — one EUP op.
    logits = jnp.dot(h2.astype(jnp.bfloat16), w3_ref[...].astype(jnp.bfloat16),
                     preferred_element_type=jnp.float32) + b3_ref[...]
    mu_ref[...] = (0.5 * jnp.tanh(0.5 * logits) + 0.5).astype(mu_ref.dtype)


def _round_up(x, m):
    return ((x + m - 1) // m) * m


def gaussian_actor_forward(state, params, *, tb=None):
    """state: [B, state_dim] float32 -> mu: [B, action_dim] float32 in (0, 1)."""
    w1, b1, w2, b2, w3, b3 = params
    batch, state_dim = state.shape
    h0 = w1.shape[1]
    h1 = w2.shape[1]
    action_dim = w3.shape[1]

    # Batch tile: MXU-height-ish for big batches, rounded-up batch for small ones.
    if tb is None:
        tb = 256 if batch >= 256 else _round_up(batch, 8)
    grid = (pl.cdiv(batch, tb),)

    def batch_tiled(shape):
        return pl.BlockSpec(shape, lambda i: (i, 0))

    def resident(shape):  # weights/biases: same block every grid step -> DMA'd once
        return pl.BlockSpec(shape, lambda i: (0, 0))

    return pl.pallas_call(
        gaussian_actor_kernel,
        out_shape=jax.ShapeDtypeStruct((batch, action_dim), jnp.float32),
        grid=grid,
        in_specs=[
            batch_tiled((tb, state_dim)),
            resident((state_dim, h0)), resident((1, h0)),
            resident((h0, h1)), resident((1, h1)),
            resident((h1, action_dim)), resident((1, action_dim)),
        ],
        out_specs=batch_tiled((tb, action_dim)),
        compiler_params=pltpu.CompilerParams(
            dimension_semantics=("parallel",),
        ),
    )(state, w1, b1, w2, b2, w3, b3)


def init_params(key, state_dim, hidden_sizes, action_dim):
    """Deterministic orthogonal init (gain=0.01), zero biases — mirrors init_net."""
    sizes = [state_dim, *hidden_sizes, action_dim]
    ortho = jax.nn.initializers.orthogonal(scale=0.01)
    params = []
    for i in range(len(sizes) - 1):
        key, sub = jax.random.split(key)
        w = ortho(sub, (sizes[i], sizes[i + 1]), jnp.float32)  # [in, out]
        b = jnp.zeros((1, sizes[i + 1]), jnp.float32)
        params.extend([w, b])
    return tuple(params)


def reference_forward(state, params):
    w1, b1, w2, b2, w3, b3 = params
    h1 = jnp.maximum(state @ w1 + b1, 0.0)
    h2 = jnp.maximum(h1 @ w2 + b2, 0.0)
    return jax.nn.sigmoid(h2 @ w3 + b3)


if __name__ == "__main__":
    batch = 64            # small, but large enough to exercise a multi-step batch grid
    state_dim = 32
    hidden_sizes = (32, 32)
    action_dim = 8

    key = jax.random.PRNGKey(0)
    key_state, key_params = jax.random.split(key)

    state = jax.random.normal(key_state, (batch, state_dim), dtype=jnp.float32)
    params = init_params(key_params, state_dim, hidden_sizes, action_dim)

    # NOTE: forward() does not use log_std / action bounds; those only appear in get_dist,
    # which is elementwise glue (affine rescale + exp) outside the hot path.

    mu = gaussian_actor_forward(state, params, tb=16)   # grid=(4,) to exercise tiling
    jax.block_until_ready(mu)

    ref = reference_forward(state, params)              # f32 reference
    assert mu.shape == (batch, action_dim)
    # bf16 matmul operands vs. f32 reference -> loosened (still tight) tolerance.
    assert jnp.allclose(mu, ref, atol=2e-3, rtol=1e-3), "mismatch vs JAX reference"
    assert bool(jnp.all((mu > 0.0) & (mu < 1.0)))

    # Also sanity-check the default (single-tile) path used for small batches.
    mu_default = gaussian_actor_forward(state, params)
    jax.block_until_ready(mu_default)
    assert jnp.allclose(mu_default, ref, atol=2e-3, rtol=1e-3)

    print("KERNEL_OK")
</pallas_src>

<mosaic_0001>
module attributes {stable_mosaic.version = 11 : i64} {
  func.func @gaussian_actor_kernel(%arg0: i32, %arg1: memref<16x32xf32, #tpu.memory_space<vmem>>, %arg2: memref<32x32xf32, #tpu.memory_space<vmem>>, %arg3: memref<1x32xf32, #tpu.memory_space<vmem>>, %arg4: memref<32x32xf32, #tpu.memory_space<vmem>>, %arg5: memref<1x32xf32, #tpu.memory_space<vmem>>, %arg6: memref<32x8xf32, #tpu.memory_space<vmem>>, %arg7: memref<1x8xf32, #tpu.memory_space<vmem>>, %arg8: memref<16x8xf32, #tpu.memory_space<vmem>>) attributes {dimension_semantics = [#tpu.dimension_semantics<parallel>], iteration_bounds = array<i64: 4>, scalar_prefetch = 0 : i64, scratch_operands = 0 : i64, tpu.core_type = #tpu.core_type<tc>, window_params = [{transform_indices = @transform_0, window_bounds = array<i64: 16, 32>}, {pipeline_mode = #tpu.pipeline_mode<synchronous>, transform_indices = @transform_1, window_bounds = array<i64: 32, 32>}, {pipeline_mode = #tpu.pipeline_mode<synchronous>, transform_indices = @transform_2, window_bounds = array<i64: 1, 32>}, {pipeline_mode = #tpu.pipeline_mode<synchronous>, transform_indices = @transform_3, window_bounds = array<i64: 32, 32>}, {pipeline_mode = #tpu.pipeline_mode<synchronous>, transform_indices = @transform_4, window_bounds = array<i64: 1, 32>}, {pipeline_mode = #tpu.pipeline_mode<synchronous>, transform_indices = @transform_5, window_bounds = array<i64: 32, 8>}, {pipeline_mode = #tpu.pipeline_mode<synchronous>, transform_indices = @transform_6, window_bounds = array<i64: 1, 8>}, {transform_indices = @transform_7, window_bounds = array<i64: 16, 8>}]} {
    %c0 = arith.constant 0 : index
    %c0_0 = arith.constant 0 : index
    %0 = vector.load %arg1[%c0, %c0_0] : memref<16x32xf32, #tpu.memory_space<vmem>>, vector<16x32xf32>
    %1 = arith.truncf %0 : vector<16x32xf32> to vector<16x32xbf16>
    %c0_1 = arith.constant 0 : index
    %c0_2 = arith.constant 0 : index
    %2 = vector.load %arg2[%c0_1, %c0_2] : memref<32x32xf32, #tpu.memory_space<vmem>>, vector<32x32xf32>
    %3 = arith.truncf %2 : vector<32x32xf32> to vector<32x32xbf16>
    %cst = arith.constant dense<0.000000e+00> : vector<16x32xf32>
    %4 = tpu.matmul %1, %3, %cst {dimension_numbers = #tpu.dot_dimension_numbers<[1], [0], [0], [1], [0, 0, 1, 1], [], []>} : vector<16x32xbf16>, vector<32x32xbf16>, vector<16x32xf32> -> vector<16x32xf32>
    %c0_3 = arith.constant 0 : index
    %c0_4 = arith.constant 0 : index
    %5 = vector.load %arg3[%c0_3, %c0_4] : memref<1x32xf32, #tpu.memory_space<vmem>>, vector<1x32xf32>
    %6 = vector.broadcast %5 : vector<1x32xf32> to vector<16x32xf32>
    %7 = arith.addf %4, %6 : vector<16x32xf32>
    %cst_5 = arith.constant 0.000000e+00 : f32
    %8 = vector.broadcast %cst_5 : f32 to vector<16x32xf32>
    %9 = arith.maximumf %7, %8 : vector<16x32xf32>
    %10 = arith.truncf %9 : vector<16x32xf32> to vector<16x32xbf16>
    %c0_6 = arith.constant 0 : index
    %c0_7 = arith.constant 0 : index
    %11 = vector.load %arg4[%c0_6, %c0_7] : memref<32x32xf32, #tpu.memory_space<vmem>>, vector<32x32xf32>
    %12 = arith.truncf %11 : vector<32x32xf32> to vector<32x32xbf16>
    %cst_8 = arith.constant dense<0.000000e+00> : vector<16x32xf32>
    %13 = tpu.matmul %10, %12, %cst_8 {dimension_numbers = #tpu.dot_dimension_numbers<[1], [0], [0], [1], [0, 0, 1, 1], [], []>} : vector<16x32xbf16>, vector<32x32xbf16>, vector<16x32xf32> -> vector<16x32xf32>
    %c0_9 = arith.constant 0 : index
    %c0_10 = arith.constant 0 : index
    %14 = vector.load %arg5[%c0_9, %c0_10] : memref<1x32xf32, #tpu.memory_space<vmem>>, vector<1x32xf32>
    %15 = vector.broadcast %14 : vector<1x32xf32> to vector<16x32xf32>
    %16 = arith.addf %13, %15 : vector<16x32xf32>
    %cst_11 = arith.constant 0.000000e+00 : f32
    %17 = vector.broadcast %cst_11 : f32 to vector<16x32xf32>
    %18 = arith.maximumf %16, %17 : vector<16x32xf32>
    %19 = arith.truncf %18 : vector<16x32xf32> to vector<16x32xbf16>
    %c0_12 = arith.constant 0 : index
    %c0_13 = arith.constant 0 : index
    %20 = vector.load %arg6[%c0_12, %c0_13] : memref<32x8xf32, #tpu.memory_space<vmem>>, vector<32x8xf32>
    %21 = arith.truncf %20 : vector<32x8xf32> to vector<32x8xbf16>
    %cst_14 = arith.constant dense<0.000000e+00> : vector<16x8xf32>
    %22 = tpu.matmul %19, %21, %cst_14 {dimension_numbers = #tpu.dot_dimension_numbers<[1], [0], [0], [1], [0, 0, 1, 1], [], []>} : vector<16x32xbf16>, vector<32x8xbf16>, vector<16x8xf32> -> vector<16x8xf32>
    %c0_15 = arith.constant 0 : index
    %c0_16 = arith.constant 0 : index
    %23 = vector.load %arg7[%c0_15, %c0_16] : memref<1x8xf32, #tpu.memory_space<vmem>>, vector<1x8xf32>
    %24 = vector.broadcast %23 : vector<1x8xf32> to vector<16x8xf32>
    %25 = arith.addf %22, %24 : vector<16x8xf32>
    %cst_17 = arith.constant 5.000000e-01 : f32
    %26 = vector.broadcast %cst_17 : f32 to vector<16x8xf32>
    %27 = arith.mulf %26, %25 : vector<16x8xf32>
    %28 = math.tanh %27 : vector<16x8xf32>
    %cst_18 = arith.constant 5.000000e-01 : f32
    %29 = vector.broadcast %cst_18 : f32 to vector<16x8xf32>
    %30 = arith.mulf %29, %28 : vector<16x8xf32>
    %cst_19 = arith.constant 5.000000e-01 : f32
    %31 = vector.broadcast %cst_19 : f32 to vector<16x8xf32>
    %32 = arith.addf %30, %31 : vector<16x8xf32>
    %c0_20 = arith.constant 0 : index
    %c0_21 = arith.constant 0 : index
    %33 = vector.load %arg8[%c0_20, %c0_21] : memref<16x8xf32, #tpu.memory_space<vmem>>, vector<16x8xf32>
    tpu.vector_store %arg8[%c0_20, %c0_21], %32 {strides = array<i32>} : memref<16x8xf32, #tpu.memory_space<vmem>>, vector<16x8xf32>,
    return
  }
  func.func @transform_0(%arg0: i32) -> (i32, i32) {
    %c0_i32 = arith.constant 0 : i32
    %c0_i32_0 = arith.constant 0 : i32
    return %arg0, %c0_i32 : i32, i32
  }
  func.func @transform_1(%arg0: i32) -> (i32, i32) {
    %c0_i32 = arith.constant 0 : i32
    %c0_i32_0 = arith.constant 0 : i32
    %c0_i32_1 = arith.constant 0 : i32
    return %c0_i32, %c0_i32_0 : i32, i32
  }
  func.func @transform_2(%arg0: i32) -> (i32, i32) {
    %c0_i32 = arith.constant 0 : i32
    %c0_i32_0 = arith.constant 0 : i32
    %c0_i32_1 = arith.constant 0 : i32
    return %c0_i32, %c0_i32_0 : i32, i32
  }
  func.func @transform_3(%arg0: i32) -> (i32, i32) {
    %c0_i32 = arith.constant 0 : i32
    %c0_i32_0 = arith.constant 0 : i32
    %c0_i32_1 = arith.constant 0 : i32
    return %c0_i32, %c0_i32_0 : i32, i32
  }
  func.func @transform_4(%arg0: i32) -> (i32, i32) {
    %c0_i32 = arith.constant 0 : i32
    %c0_i32_0 = arith.constant 0 : i32
    %c0_i32_1 = arith.constant 0 : i32
    return %c0_i32, %c0_i32_0 : i32, i32
  }
  func.func @transform_5(%arg0: i32) -> (i32, i32) {
    %c0_i32 = arith.constant 0 : i32
    %c0_i32_0 = arith.constant 0 : i32
    %c0_i32_1 = arith.constant 0 : i32
    return %c0_i32, %c0_i32_0 : i32, i32
  }
  func.func @transform_6(%arg0: i32) -> (i32, i32) {
    %c0_i32 = arith.constant 0 : i32
    %c0_i32_0 = arith.constant 0 : i32
    %c0_i32_1 = arith.constant 0 : i32
    return %c0_i32, %c0_i32_0 : i32, i32
  }
  func.func @transform_7(%arg0: i32) -> (i32, i32) {
    %c0_i32 = arith.constant 0 : i32
    %c0_i32_0 = arith.constant 0 : i32
    return %arg0, %c0_i32 : i32, i32
  }
}

</mosaic_0001>

<llo_original>
// kernel: tpu_custom_call.1
$region0: #{tpu_custom_call.1}
  #allocation0 [shape = 'u32[]', space=smem, size = 0x4, offset = 0x4, fixed_abs, tag = 'smem constant byte address 0x4 - core index']
  #allocation1 [shape = 'u32[144,128]{1,0:T(1,128)}', space=vmem, size = 0x12000, scoped, tag = 'internal scratch']
  %s0 = inlined_call_operand.vmem [shape: f32[64,32], index: 0, kind: input, shape index: {}]
  %s1 = inlined_call_operand.vmem [shape: f32[32,32], index: 1, kind: input, shape index: {}]
  %s2 = inlined_call_operand.vmem [shape: f32[1,32], index: 2, kind: input, shape index: {}]
  %s3 = inlined_call_operand.vmem [shape: f32[32,32], index: 3, kind: input, shape index: {}]
  %s4 = inlined_call_operand.vmem [shape: f32[1,32], index: 4, kind: input, shape index: {}]
  %s5 = inlined_call_operand.vmem [shape: f32[32,8], index: 5, kind: input, shape index: {}]
  %s6 = inlined_call_operand.vmem [shape: f32[1,8], index: 6, kind: input, shape index: {}]
  %s7 = inlined_call_operand.vmem [shape: f32[64,8], index: 7, kind: output, shape index: {}]
  %s8 = sld [smem:[#allocation0]]
  $region61: #{tpu_custom_call.1} parent=0
    _
  %s10 = ssub.s32 1, %s8
  %s11 = scalar_select 0, %s10, %s8
  loop: start=0, step=1, limit=6
  $region2: #{tpu_custom_call.1} parent=0 // loop_pre_header
    _
  $region3: #{tpu_custom_call.1} parent=0 // loop_header
    %s13 = sphi 0, %s17
    %p14 = scmp.ge.s32.totalorder %s13, 6
    %s23 = sphi 0, %s25
    %s26 = sphi 0, %s23
    %s27 = sphi 0, %s26
    %s43 = sphi 0, %s27
    %s47 = sphi 0, %s47
    %s49 = sphi 0, %s47
    %s50 = sphi 0, %s49
    %s64 = sphi 0, %s50
    %s68 = sphi 0, %s68
    %s70 = sphi 0, %s68
    %s71 = sphi 0, %s70
    %s85 = sphi 0, %s71
    %s89 = sphi 0, %s89
    %s91 = sphi 0, %s89
    %s92 = sphi 0, %s91
    %s106 = sphi 0, %s92
    %s110 = sphi 0, %s110
    %s112 = sphi 0, %s110
    %s113 = sphi 0, %s112
    %s127 = sphi 0, %s113
    %s131 = sphi 0, %s131
    %s133 = sphi 0, %s131
    %s134 = sphi 0, %s133
    %s148 = sphi 0, %s134
    %s152 = sphi 0, %s152
    %s154 = sphi 0, %s152
    %s155 = sphi 0, %s154
    %s169 = sphi 0, %s155
    %s175 = sphi 0, %s177
    %s178 = sphi 0, %s175
    %s179 = sphi 0, %s178
    %s195 = sphi 0, %s179
  $region4: #{tpu_custom_call.1} parent=0 // loop_header_branch
    %16 = sbr.rel (%p14) target = $region8
  $region5: #{tpu_custom_call.1} parent=0 // loop_body
    %s18 = ssub.s32 %s13, 1
    %s19 = ssub.s32 %s13, 2
    %s20 = sadd.s32 %s13, 1
    %s21 = ssub.s32 %s13, %s20
    %p22 = scmp.eq.s32.totalorder %s21, 0
    %s24 = sadd.s32 %s23, 1
    %s25 = scalar_select %p22, %s23, %s24
    %p28 = pneg %p22
    %p29 = scmp.eq.s32.totalorder %s13, 3
    %p30 = por %p28, %p29
    %p31 = scmp.ne.s32.totalorder %s23, %s26
    %p32 = scmp.eq.s32.totalorder %s13, 0
    %p33 = por %p31, %p32
    %p34 = scmp.ne.s32.totalorder %s23, %s26
    %p35 = scmp.eq.s32.totalorder %s18, 3
    %p36 = por %p34, %p35
    %p37 = scmp.ne.s32.totalorder %s26, %s27
    %p38 = scmp.eq.s32.totalorder %s18, 0
    %p39 = por %p37, %p38
    %p40 = scmp.ne.s32.totalorder %s26, %s27
    %p41 = scmp.eq.s32.totalorder %s19, 3
    %p42 = por %p40, %p41
    %p44 = scmp.ne.s32.totalorder %s27, %s43
    %p45 = scmp.eq.s32.totalorder %s19, 0
    %p46 = por %p44, %p45
    %s48 = sadd.s32 %s47, 1
    %p51 = scmp.eq.s32.totalorder %s13, 3
    %p52 = scmp.ne.s32.totalorder %s47, %s49
    %p53 = scmp.eq.s32.totalorder %s13, 0
    %p54 = por %p52, %p53
    %p55 = scmp.ne.s32.totalorder %s47, %s49
    %p56 = scmp.eq.s32.totalorder %s18, 3
    %p57 = por %p55, %p56
    %p58 = scmp.ne.s32.totalorder %s49, %s50
    %p59 = scmp.eq.s32.totalorder %s18, 0
    %p60 = por %p58, %p59
    %p61 = scmp.ne.s32.totalorder %s49, %s50
    %p62 = scmp.eq.s32.totalorder %s19, 3
    %p63 = por %p61, %p62
    %p65 = scmp.ne.s32.totalorder %s50, %s64
    %p66 = scmp.eq.s32.totalorder %s19, 0
    %p67 = por %p65, %p66
    %s69 = sadd.s32 %s68, 1
    %p72 = scmp.eq.s32.totalorder %s13, 3
    %p73 = scmp.ne.s32.totalorder %s68, %s70
    %p74 = scmp.eq.s32.totalorder %s13, 0
    %p75 = por %p73, %p74
    %p76 = scmp.ne.s32.totalorder %s68, %s70
    %p77 = scmp.eq.s32.totalorder %s18, 3
    %p78 = por %p76, %p77
    %p79 = scmp.ne.s32.totalorder %s70, %s71
    %p80 = scmp.eq.s32.totalorder %s18, 0
    %p81 = por %p79, %p80
    %p82 = scmp.ne.s32.totalorder %s70, %s71
    %p83 = scmp.eq.s32.totalorder %s19, 3
    %p84 = por %p82, %p83
    %p86 = scmp.ne.s32.totalorder %s71, %s85
    %p87 = scmp.eq.s32.totalorder %s19, 0
    %p88 = por %p86, %p87
    %s90 = sadd.s32 %s89, 1
    %p93 = scmp.eq.s32.totalorder %s13, 3
    %p94 = scmp.ne.s32.totalorder %s89, %s91
    %p95 = scmp.eq.s32.totalorder %s13, 0
    %p96 = por %p94, %p95
    %p97 = scmp.ne.s32.totalorder %s89, %s91
    %p98 = scmp.eq.s32.totalorder %s18, 3
    %p99 = por %p97, %p98
    %p100 = scmp.ne.s32.totalorder %s91, %s92
    %p101 = scmp.eq.s32.totalorder %s18, 0
    %p102 = por %p100, %p101
    %p103 = scmp.ne.s32.totalorder %s91, %s92
    %p104 = scmp.eq.s32.totalorder %s19, 3
    %p105 = por %p103, %p104
    %p107 = scmp.ne.s32.totalorder %s92, %s106
    %p108 = scmp.eq.s32.totalorder %s19, 0
    %p109 = por %p107, %p108
    %s111 = sadd.s32 %s110, 1
    %p114 = scmp.eq.s32.totalorder %s13, 3
    %p115 = scmp.ne.s32.totalorder %s110, %s112
    %p116 = scmp.eq.s32.totalorder %s13, 0
    %p117 = por %p115, %p116
    %p118 = scmp.ne.s32.totalorder %s110, %s112
    %p119 = scmp.eq.s32.totalorder %s18, 3
    %p120 = por %p118, %p119
    %p121 = scmp.ne.s32.totalorder %s112, %s113
    %p122 = scmp.eq.s32.totalorder %s18, 0
    %p123 = por %p121, %p122
    %p124 = scmp.ne.s32.totalorder %s112, %s113
    %p125 = scmp.eq.s32.totalorder %s19, 3
    %p126 = por %p124, %p125
    %p128 = scmp.ne.s32.totalorder %s113, %s127
    %p129 = scmp.eq.s32.totalorder %s19, 0
    %p130 = por %p128, %p129
    %s132 = sadd.s32 %s131, 1
    %p135 = scmp.eq.s32.totalorder %s13, 3
    %p136 = scmp.ne.s32.totalorder %s131, %s133
    %p137 = scmp.eq.s32.totalorder %s13, 0
    %p138 = por %p136, %p137
    %p139 = scmp.ne.s32.totalorder %s131, %s133
    %p140 = scmp.eq.s32.totalorder %s18, 3
    %p141 = por %p139, %p140
    %p142 = scmp.ne.s32.totalorder %s133, %s134
    %p143 = scmp.eq.s32.totalorder %s18, 0
    %p144 = por %p142, %p143
    %p145 = scmp.ne.s32.totalorder %s133, %s134
    %p146 = scmp.eq.s32.totalorder %s19, 3
    %p147 = por %p145, %p146
    %p149 = scmp.ne.s32.totalorder %s134, %s148
    %p150 = scmp.eq.s32.totalorder %s19, 0
    %p151 = por %p149, %p150
    %s153 = sadd.s32 %s152, 1
    %p156 = scmp.eq.s32.totalorder %s13, 3
    %p157 = scmp.ne.s32.totalorder %s152, %s154
    %p158 = scmp.eq.s32.totalorder %s13, 0
    %p159 = por %p157, %p158
    %p160 = scmp.ne.s32.totalorder %s152, %s154
    %p161 = scmp.eq.s32.totalorder %s18, 3
    %p162 = por %p160, %p161
    %p163 = scmp.ne.s32.totalorder %s154, %s155
    %p164 = scmp.eq.s32.totalorder %s18, 0
    %p165 = por %p163, %p164
    %p166 = scmp.ne.s32.totalorder %s154, %s155
    %p167 = scmp.eq.s32.totalorder %s19, 3
    %p168 = por %p166, %p167
    %p170 = scmp.ne.s32.totalorder %s155, %s169
    %p171 = scmp.eq.s32.totalorder %s19, 0
    %p172 = por %p170, %p171
    %s173 = ssub.s32 %s13, %s20
    %p174 = scmp.eq.s32.totalorder %s173, 0
    %s176 = sadd.s32 %s175, 1
    %s177 = scalar_select %p174, %s175, %s176
    %p180 = pneg %p174
    %p181 = scmp.eq.s32.totalorder %s13, 3
    %p182 = por %p180, %p181
    %p183 = scmp.ne.s32.totalorder %s175, %s178
    %p184 = scmp.eq.s32.totalorder %s13, 0
    %p185 = por %p183, %p184
    %p186 = scmp.ne.s32.totalorder %s175, %s178
    %p187 = scmp.eq.s32.totalorder %s18, 3
    %p188 = por %p186, %p187
    %p189 = scmp.ne.s32.totalorder %s178, %s179
    %p190 = scmp.eq.s32.totalorder %s18, 0
    %p191 = por %p189, %p190
    %p192 = scmp.ne.s32.totalorder %s178, %s179
    %p193 = scmp.eq.s32.totalorder %s19, 3
    %p194 = por %p192, %p193
    %p196 = scmp.ne.s32.totalorder %s179, %s195
    %p197 = scmp.eq.s32.totalorder %s19, 0
    %p198 = por %p196, %p197
    %p199 = scmp.le.s32.totalorder 1, %s13
    %p200 = scmp.lt.s32.totalorder %s13, 5
    %p201 = pnand %p199, %p200
    %p202 = pneg %p201
    // Predicated region
    $region9: #{tpu_custom_call.1} parent=5 // pred_check
      _
    $region10: #{tpu_custom_call.1} parent=5 // pred_check_branch
      %204 = sbr.rel (%p201) target = $region12
    $region11: #{tpu_custom_call.1} parent=5 // pred_region
      %s205 = ssub.s32 %s13, 1
      // Predicated region
      $region13: #{tpu_custom_call.1} parent=11 // pred_check
        %p206 = pneg %p60
      $region14: #{tpu_custom_call.1} parent=11 // pred_check_branch
        %208 = sbr.rel (%p206) target = $region16
      $region15: #{tpu_custom_call.1} parent=11 // pred_region
        _
      $region16: #{tpu_custom_call.1} parent=11 // pred_fallthru
        _
      // Predicated region
      $region17: #{tpu_custom_call.1} parent=11 // pred_check
        %p209 = pneg %p81
      $region18: #{tpu_custom_call.1} parent=11 // pred_check_branch
        %211 = sbr.rel (%p209) target = $region20
      $region19: #{tpu_custom_call.1} parent=11 // pred_region
        _
      $region20: #{tpu_custom_call.1} parent=11 // pred_fallthru
        _
      // Predicated region
      $region21: #{tpu_custom_call.1} parent=11 // pred_check
        %p212 = pneg %p102
      $region22: #{tpu_custom_call.1} parent=11 // pred_check_branch
        %214 = sbr.rel (%p212) target = $region24
      $region23: #{tpu_custom_call.1} parent=11 // pred_region
        _
      $region24: #{tpu_custom_call.1} parent=11 // pred_fallthru
        _
      // Predicated region
      $region25: #{tpu_custom_call.1} parent=11 // pred_check
        %p215 = pneg %p123
      $region26: #{tpu_custom_call.1} parent=11 // pred_check_branch
        %217 = sbr.rel (%p215) target = $region28
      $region27: #{tpu_custom_call.1} parent=11 // pred_region
        _
      $region28: #{tpu_custom_call.1} parent=11 // pred_fallthru
        _
      // Predicated region
      $region29: #{tpu_custom_call.1} parent=11 // pred_check
        %p218 = pneg %p144
      $region30: #{tpu_custom_call.1} parent=11 // pred_check_branch
        %220 = sbr.rel (%p218) target = $region32
      $region31: #{tpu_custom_call.1} parent=11 // pred_region
        _
      $region32: #{tpu_custom_call.1} parent=11 // pred_fallthru
        _
      // Predicated region
      $region33: #{tpu_custom_call.1} parent=11 // pred_check
        %p221 = pneg %p165
      $region34: #{tpu_custom_call.1} parent=11 // pred_check_branch
        %223 = sbr.rel (%p221) target = $region36
      $region35: #{tpu_custom_call.1} parent=11 // pred_region
        _
      $region36: #{tpu_custom_call.1} parent=11 // pred_fallthru
        _
    $region12: #{tpu_custom_call.1} parent=5 // pred_fallthru
      _
    %p224 = scmp.lt.s32.totalorder %s13, 4
    // Predicated region
    $region37: #{tpu_custom_call.1} parent=5 // pred_check
      %p225 = pneg %p224
    $region38: #{tpu_custom_call.1} parent=5 // pred_check_branch
      %227 = sbr.rel (%p225) target = $region40
    $region39: #{tpu_custom_call.1} parent=5 // pred_region
      // Predicated region
      $region41: #{tpu_custom_call.1} parent=39 // pred_check
        %p228 = pneg %p33
      $region42: #{tpu_custom_call.1} parent=39 // pred_check_branch
        %230 = sbr.rel (%p228) target = $region44
      $region43: #{tpu_custom_call.1} parent=39 // pred_region
        %s231 = smul.u32 2, %s13
        %p232 = scmp.lt.s32.totalorder %s231, 7
        %s233 = scalar_select %p232, %s231, 7
        %s234 = smul.addr %s233, 8
        %s235 = scalar_lea.vmem %s0, %s234
        %s236 = smul.u32 2, %s13
      $region44: #{tpu_custom_call.1} parent=39 // pred_fallthru
        _
    $region40: #{tpu_custom_call.1} parent=5 // pred_fallthru
      _
    %p237 = scmp.le.s32.totalorder 1, %s13
    %p238 = scmp.lt.s32.totalorder %s13, 5
    %p239 = pnand %p237, %p238
    %p240 = pneg %p239
    // Predicated region
    $region45: #{tpu_custom_call.1} parent=5 // pred_check
      _
    $region46: #{tpu_custom_call.1} parent=5 // pred_check_branch
      %242 = sbr.rel (%p239) target = $region48
    $region47: #{tpu_custom_call.1} parent=5 // pred_region
      %s243 = ssub.s32 %s13, 1
      %s244 = smul.u32 2, %s18
      %p245 = scmp.lt.s32.totalorder %s244, 7
      %s246 = scalar_select %p245, %s244, 7
      %s247 = smul.addr %s246, 8
      %s248 = scalar_lea.vmem %s0, %s247
      %p249 = pneg %p39
      %p250 = pneg %p36
      %p251 = pneg %p60
      %p252 = pneg %p57
      %p253 = pneg %p81
      %p254 = pneg %p78
      %p255 = pneg %p102
      %p256 = pneg %p99
      %p257 = pneg %p123
      %p258 = pneg %p120
      %p259 = pneg %p144
      %p260 = pneg %p141
      %p261 = pneg %p165
      %p262 = pneg %p162
      %p263 = pneg %p191
      %p264 = pneg %p188
      %s265 = smul.u32 2, %s18
      %p266 = scmp.lt.s32.totalorder %s265, 7
      %s267 = scalar_select %p266, %s265, 7
      %s268 = smul.addr %s267, 8
      %s269 = scalar_lea.vmem %s7, %s268
      %s270 = smul.u32 2, %s18
      %p271 = scmp.lt.s32.totalorder %s270, 7
      %s272 = scalar_select %p271, %s270, 7
      %s273 = smul.addr %s272, 8
      %s274 = scalar_lea.vmem %s0, %s273
      %s275 = smul.u32 2, %s18
      %s276 = smul.u32 2, %s18
      %p277 = scmp.lt.s32.totalorder %s276, 7
      %s278 = scalar_select %p277, %s276, 7
      %s279 = smul.addr %s278, 8
      %s280 = scalar_lea.vmem %s7, %s279
      %s281 = smul.u32 2, %s18
      %v283 = vld [vmem:[%s274] sm:$0xff]
      %v284 = vld [vmem:[%s274 + $0x8] sm:$0xff]
      %v285 = vpack.c.bf16 %v284, %v283
      %v286 = vld [vmem:[%s1] sm:$0xff]
      %v287 = vld [vmem:[%s1 + $0x8] sm:$0xff]
      %v288 = vld [vmem:[%s1 + $0x10] sm:$0xff]
      %v289 = vld [vmem:[%s1 + $0x18] sm:$0xff]
      %v290 = vpack.c.bf16 %v287, %v286
      %v291 = vpack.c.bf16 %v289, %v288
      %v292 = vld [vmem:[%s2] sm:$0x1]
      %v294 = vlaneseq
      %v295 = vshrl.u32 %v294, 7
      %v296 = vsub.s32 0, %v295
      %v297 = vrot.slane %v292, %v296
      %vm299 = vcmask 261120
      %v301 = vsel %vm299, %v285, 0
      %303 = vmatprep.subr.bf16.mxu0 0
      %304 = vmatpush1.bf16.msra.mxu0 %v290
      %305 = vmatprep.subr.bf16.mxu0 0
      %306 = vmatpush1.bf16.msra.mxu0 %v291
      %307 = vmatprep.subr.bf16.mxu0 0
      %308 = vmatpush1.bf16.msra.mxu0 0
      %309 = vmatprep.subr.bf16.mxu0 0
      %310 = vmatpush1.bf16.msra.mxu0 0
      %311 = vmatprep.subr.bf16.mxu0 0
      %312 = vmatpush1.bf16.msra.mxu0 0
      %313 = vmatprep.subr.bf16.mxu0 0
      %314 = vmatpush1.bf16.msra.mxu0 0
      %315 = vmatprep.subr.bf16.mxu0 0
      %316 = vmatpush1.bf16.msra.mxu0 0
      %317 = vmatprep.subr.bf16.mxu0 0
      %318 = vmatpush1.bf16.msra.mxu0 0
      %319 = vmatprep.subr.bf16.mxu0 0
      %320 = vmatpush1.bf16.msra.mxu0 0
      %321 = vmatprep.subr.bf16.mxu0 0
      %322 = vmatpush1.bf16.msra.mxu0 0
      %323 = vmatprep.subr.bf16.mxu0 0
      %324 = vmatpush1.bf16.msra.mxu0 0
      %325 = vmatprep.subr.bf16.mxu0 0
      %326 = vmatpush1.bf16.msra.mxu0 0
      %327 = vmatprep.subr.bf16.mxu0 0
      %328 = vmatpush1.bf16.msra.mxu0 0
      %329 = vmatprep.subr.bf16.mxu0 0
      %330 = vmatpush1.bf16.msra.mxu0 0
      %331 = vmatprep.subr.bf16.mxu0 0
      %332 = vmatpush1.bf16.msra.mxu0 0
      %333 = vmatprep.subr.bf16.mxu0 0
      %334 = vmatpush1.bf16.msra.mxu0 0
      %335 = vmatprep.mubr.bf16.mxu0 0
      %336 = vmatmul.mubr.bf16.gmra.mrb[0].mxu0 %v301
      %v337 = vpop.f32.mrb[0].mxu0
      %v338 = vadd.f32 %v297, %v337
      %v339 = vpop.f32.mrb[0].mxu0
      %v340 = vpop.f32.mrb[0].mxu0
      %v341 = vadd.f32 %v297, %v340
      %v342 = vpop.f32.mrb[0].mxu0
      %343 = vdwg.mxu0
      %v344 = vmax.f32 %v338, 0.0
      %v345 = vmax.f32 %v341, 0.0
      %v346 = vpack.c.bf16 %v345, %v344
      %v347 = vld [vmem:[%s3] sm:$0xff]
      %v348 = vld [vmem:[%s3 + $0x8] sm:$0xff]
      %v349 = vld [vmem:[%s3 + $0x10] sm:$0xff]
      %v350 = vld [vmem:[%s3 + $0x18] sm:$0xff]
      %v351 = vpack.c.bf16 %v348, %v347
      %v352 = vpack.c.bf16 %v350, %v349
      %v353 = vld [vmem:[%s4] sm:$0x1]
      %v355 = vlaneseq
      %v356 = vshrl.u32 %v355, 7
      %v357 = vsub.s32 0, %v356
      %v358 = vrot.slane %v353, %v357
      %v361 = vsel %vm299, %v346, 0
      %363 = vmatprep.subr.bf16.mxu0 0
      %364 = vmatpush1.bf16.msra.mxu0 %v351
      %365 = vmatprep.subr.bf16.mxu0 0
      %366 = vmatpush1.bf16.msra.mxu0 %v352
      %367 = vmatprep.subr.bf16.mxu0 0
      %368 = vmatpush1.bf16.msra.mxu0 0
      %369 = vmatprep.subr.bf16.mxu0 0
      %370 = vmatpush1.bf16.msra.mxu0 0
      %371 = vmatprep.subr.bf16.mxu0 0
      %372 = vmatpush1.bf16.msra.mxu0 0
      %373 = vmatprep.subr.bf16.mxu0 0
      %374 = vmatpush1.bf16.msra.mxu0 0
      %375 = vmatprep.subr.bf16.mxu0 0
      %376 = vmatpush1.bf16.msra.mxu0 0
      %377 = vmatprep.subr.bf16.mxu0 0
      %378 = vmatpush1.bf16.msra.mxu0 0
      %379 = vmatprep.subr.bf16.mxu0 0
      %380 = vmatpush1.bf16.msra.mxu0 0
      %381 = vmatprep.subr.bf16.mxu0 0
      %382 = vmatpush1.bf16.msra.mxu0 0
      %383 = vmatprep.subr.bf16.mxu0 0
      %384 = vmatpush1.bf16.msra.mxu0 0
      %385 = vmatprep.subr.bf16.mxu0 0
      %386 = vmatpush1.bf16.msra.mxu0 0
      %387 = vmatprep.subr.bf16.mxu0 0
      %388 = vmatpush1.bf16.msra.mxu0 0
      %389 = vmatprep.subr.bf16.mxu0 0
      %390 = vmatpush1.bf16.msra.mxu0 0
      %391 = vmatprep.subr.bf16.mxu0 0
      %392 = vmatpush1.bf16.msra.mxu0 0
      %393 = vmatprep.subr.bf16.mxu0 0
      %394 = vmatpush1.bf16.msra.mxu0 0
      %395 = vmatprep.mubr.bf16.mxu0 0
      %396 = vmatmul.mubr.bf16.gmra.mrb[0].mxu0 %v361
      %v397 = vpop.f32.mrb[0].mxu0
      %v398 = vadd.f32 %v358, %v397
      %v399 = vpop.f32.mrb[0].mxu0
      %v400 = vpop.f32.mrb[0].mxu0
      %v401 = vadd.f32 %v358, %v400
      %v402 = vpop.f32.mrb[0].mxu0
      %403 = vdwg.mxu0
      %v404 = vmax.f32 %v398, 0.0
      %v405 = vmax.f32 %v401, 0.0
      %v406 = vpack.c.bf16 %v405, %v404
      %v407 = vld [vmem:[%s5] sm:$0xff]
      %v408 = vld [vmem:[%s5 + $0x8] sm:$0xff]
      %v409 = vld [vmem:[%s5 + $0x10] sm:$0xff]
      %v410 = vld [vmem:[%s5 + $0x18] sm:$0xff]
      %v411 = vpack.c.bf16 %v408, %v407
      %v412 = vpack.c.bf16 %v410, %v409
      %v413 = vld [vmem:[%s6] sm:$0x1]
      %v415 = vlaneseq
      %v416 = vshrl.u32 %v415, 7
      %v417 = vsub.s32 0, %v416
      %v418 = vrot.slane %v413, %v417
      %v421 = vsel %vm299, %v406, 0
      %423 = vmatprep.subr.bf16.mxu0 0
      %424 = vmatpush1.bf16.msra.mxu0 %v411
      %425 = vmatprep.subr.bf16.mxu0 0
      %426 = vmatpush1.bf16.msra.mxu0 %v412
      %427 = vmatprep.subr.bf16.mxu0 0
      %428 = vmatpush1.bf16.msra.mxu0 0
      %429 = vmatprep.subr.bf16.mxu0 0
      %430 = vmatpush1.bf16.msra.mxu0 0
      %431 = vmatprep.subr.bf16.mxu0 0
      %432 = vmatpush1.bf16.msra.mxu0 0
      %433 = vmatprep.subr.bf16.mxu0 0
      %434 = vmatpush1.bf16.msra.mxu0 0
      %435 = vmatprep.subr.bf16.mxu0 0
      %436 = vmatpush1.bf16.msra.mxu0 0
      %437 = vmatprep.subr.bf16.mxu0 0
      %438 = vmatpush1.bf16.msra.mxu0 0
      %439 = vmatprep.subr.bf16.mxu0 0
      %440 = vmatpush1.bf16.msra.mxu0 0
      %441 = vmatprep.subr.bf16.mxu0 0
      %442 = vmatpush1.bf16.msra.mxu0 0
      %443 = vmatprep.subr.bf16.mxu0 0
      %444 = vmatpush1.bf16.msra.mxu0 0
      %445 = vmatprep.subr.bf16.mxu0 0
      %446 = vmatpush1.bf16.msra.mxu0 0
      %447 = vmatprep.subr.bf16.mxu0 0
      %448 = vmatpush1.bf16.msra.mxu0 0
      %449 = vmatprep.subr.bf16.mxu0 0
      %450 = vmatpush1.bf16.msra.mxu0 0
      %451 = vmatprep.subr.bf16.mxu0 0
      %452 = vmatpush1.bf16.msra.mxu0 0
      %453 = vmatprep.subr.bf16.mxu0 0
      %454 = vmatpush1.bf16.msra.mxu0 0
      %455 = vmatprep.mubr.bf16.mxu0 0
      %456 = vmatmul.mubr.bf16.gmra.mrb[0].mxu0 %v421
      %v457 = vpop.f32.mrb[0].mxu0
      %v458 = vadd.f32 %v418, %v457
      %v459 = vpop.f32.mrb[0].mxu0
      %v460 = vpop.f32.mrb[0].mxu0
      %v461 = vadd.f32 %v418, %v460
      %v462 = vpop.f32.mrb[0].mxu0
      %463 = vdwg.mxu0
      %v464 = vmul.f32 %v458, 0.5
      %v465 = vmul.f32 %v461, 0.5
      %v466 = vtanh.pop %v464
      %v467 = vtanh.pop %v465
      %v468 = vmul.f32 %v466, 0.5
      %v469 = vmul.f32 %v467, 0.5
      %v470 = vadd.f32 %v468, 0.5
      %v471 = vadd.f32 %v469, 0.5
      %vm472 = vcmask 64512
      %473 = vst.msk [vmem:[%s280] sm:$0xff] %vm472, %v470
      %474 = vst.msk [vmem:[%s280 + $0x8] sm:$0xff] %vm472, %v471
      %s475 = smul.u32 2, %s18
      %p476 = scmp.lt.s32.totalorder %s475, 7
      %s477 = scalar_select %p476, %s475, 7
      %s478 = smul.addr %s477, 8
      %s479 = scalar_lea.vmem %s7, %s478
      // Predicated region
      $region49: #{tpu_custom_call.1} parent=47 // pred_check
        %p480 = pneg %p188
      $region50: #{tpu_custom_call.1} parent=47 // pred_check_branch
        %482 = sbr.rel (%p480) target = $region52
      $region51: #{tpu_custom_call.1} parent=47 // pred_region
        %s483 = smul.u32 2, %s18
      $region52: #{tpu_custom_call.1} parent=47 // pred_fallthru
        _
    $region48: #{tpu_custom_call.1} parent=5 // pred_fallthru
      _
    %p484 = scmp.le.s32.totalorder 2, %s13
    // Predicated region
    $region53: #{tpu_custom_call.1} parent=5 // pred_check
      %p485 = pneg %p484
    $region54: #{tpu_custom_call.1} parent=5 // pred_check_branch
      %487 = sbr.rel (%p485) target = $region56
    $region55: #{tpu_custom_call.1} parent=5 // pred_region
      %s488 = ssub.s32 %s13, 2
      // Predicated region
      $region57: #{tpu_custom_call.1} parent=55 // pred_check
        %p489 = pneg %p194
      $region58: #{tpu_custom_call.1} parent=55 // pred_check_branch
        %491 = sbr.rel (%p489) target = $region60
      $region59: #{tpu_custom_call.1} parent=55 // pred_region
        %s492 = smul.u32 2, %s19
        %p493 = scmp.lt.s32.totalorder %s492, 7
        %s494 = scalar_select %p493, %s492, 7
        %s495 = smul.addr %s494, 8
        %s496 = scalar_lea.vmem %s7, %s495
      $region60: #{tpu_custom_call.1} parent=55 // pred_fallthru
        _
    $region56: #{tpu_custom_call.1} parent=5 // pred_fallthru
      _
  $region6: #{tpu_custom_call.1} parent=0 // loop_footer
    %s17 = sadd.s32 1, %s13
  $region7: #{tpu_custom_call.1} parent=0 // loop_footer_branch
    %12 = sbr.rel target = $region3
  $region8: #{tpu_custom_call.1} parent=0 // loop_exit
    _

</llo_original>
